<compile_context>
chip_gen: v7x
topology: tpu7x:2x2x1
jax: 0.10.0
libtpu: 0.0.40
codegen_flags: <defaults>
</compile_context>

<pallas_src>
import functools

import jax
import jax.numpy as jnp
from jax.experimental import pallas as pl
from jax.experimental.pallas import tpu as pltpu


def encoder_kernel(src_ref, rhs_ref, out_ref, *, vx, vy):
    """One token tile.

    src_ref: [3, TN] f32   row 0 = x ids, row 1 = y ids, row 2 = extra feature
    rhs_ref: [Kpad, H] f32 rows: tab_x@Wx | tab_y@Wy | wf | bias | zero pad
    out_ref: [TN, H] f32
    """
    kpad = rhs_ref.shape[0]
    tn = src_ref.shape[1]

    idx_x = src_ref[0:1, :].astype(jnp.int32)      # [1, TN]  (lane-dense)
    idx_y = src_ref[1:2, :].astype(jnp.int32)      # [1, TN]
    feat = src_ref[2:3, :]                         # [1, TN]

    # Transposed selector matrix M^T [Kpad, TN]:
    #   rows [0, Vx)        : one-hot of x id
    #   rows [Vx, Vx+Vy)    : one-hot of y id
    #   row  Vx+Vy          : feature value
    #   row  Vx+Vy+1        : constant 1.0 (bias)
    #   rows >= Vx+Vy+2     : zero (multiply zero-padded RHS rows)
    row = jax.lax.broadcasted_iota(jnp.int32, (kpad, tn), 0)
    onehot = ((row == idx_x) | (row == idx_y + vx)).astype(jnp.float32)
    lhs_t = jnp.where(row == vx + vy, feat, onehot)
    lhs_t = jnp.where(row == vx + vy + 1, 1.0, lhs_t)

    # out[n, h] = sum_k M^T[k, n] * rhs[k, h]  -> single MXU matmul [TN, H].
    out_ref[...] = jax.lax.dot_general(
        lhs_t, rhs_ref[...],
        dimension_numbers=(((0,), (0,)), ((), ())),
        preferred_element_type=jnp.float32,
        precision=jax.lax.Precision.HIGHEST)


def encoder_forward(src, tab_x, tab_y, W_t, b, *, block_n=4096):
    """src: [B,S,3] f32; tab_x: [Vx,H]; tab_y: [Vy,H]; W_t: [2H+1,H]; b: [H]."""
    B, S, C = src.shape
    assert C == 3
    Vx, H = tab_x.shape
    Vy = tab_y.shape[0]
    N = B * S
    K = Vx + Vy + 2
    Kpad = ((K + 7) // 8) * 8

    # ---- one-time folds (outside the kernel) --------------------------------
    hi = jax.lax.Precision.HIGHEST
    Wx = W_t[:H, :]
    Wy = W_t[H:2 * H, :]
    wf = W_t[2 * H:2 * H + 1, :]
    Tx = jnp.dot(tab_x, Wx, precision=hi)                 # [Vx, H]
    Ty = jnp.dot(tab_y, Wy, precision=hi)                 # [Vy, H]
    rhs = jnp.concatenate([Tx, Ty, wf, b.reshape(1, H)], axis=0)   # [K, H]
    rhs = jnp.pad(rhs, ((0, Kpad - K), (0, 0)))                    # [Kpad, H]

    # Lane-dense src: [3, N].  Pad N up to a multiple of 128 lanes so the toy
    # case also runs on exact, full tiles (padded tokens use id 0 / feat 0 and
    # their rows are sliced off afterwards).
    src_t = src.reshape(N, C).T.astype(jnp.float32)        # [3, N]
    n_pad = ((N + 127) // 128) * 128
    if n_pad != N:
        src_t = jnp.pad(src_t, ((0, 0), (0, n_pad - N)))

    # Token tile: multiple of 128 (lane dim of the src block).  Sweep
    # 1024/2048/4096 in production; keep the grid >= a few steps on v7x so the
    # "parallel" axis can be sharded across both TensorCores.
    tn = min(block_n, n_pad)
    grid = (pl.cdiv(n_pad, tn),)

    kernel = functools.partial(encoder_kernel, vx=Vx, vy=Vy)
    out = pl.pallas_call(
        kernel,
        out_shape=jax.ShapeDtypeStruct((n_pad, H), jnp.float32),
        grid=grid,
        in_specs=[
            pl.BlockSpec((C, tn), lambda i: (0, i)),       # src, lane-dense
            pl.BlockSpec((Kpad, H), lambda i: (0, 0)),     # fused RHS, resident
        ],
        out_specs=pl.BlockSpec((tn, H), lambda i: (i, 0)),
        compiler_params=pltpu.CompilerParams(
            dimension_semantics=("parallel",),
            vmem_limit_bytes=32 * 1024 * 1024),
    )(src_t, rhs)

    if n_pad != N:
        out = out[:N]
    return out.reshape(B, S, H)


def encoder_reference(src, tab_x, tab_y, W_t, b):
    ix = src[:, :, 0].astype(jnp.int32)
    iy = src[:, :, 1].astype(jnp.int32)
    inp = jnp.concatenate([tab_x[ix], tab_y[iy], src[:, :, 2:]], axis=2)
    return jnp.dot(inp, W_t, precision=jax.lax.Precision.HIGHEST) + b


if __name__ == "__main__":
    # Small, deterministic configuration.
    B, S, H = 2, 8, 32
    max_xid, max_yid = 10, 12
    Vx, Vy = max_xid + 1, max_yid + 1
    in_dim = 2 * H + 1

    key = jax.random.PRNGKey(0)
    k_ex, k_ey, k_w, k_b, k_ix, k_iy, k_f = jax.random.split(key, 7)

    # Embedding ~ N(0,1); Linear ~ U(-1/sqrt(in), 1/sqrt(in)).
    tab_x = jax.random.normal(k_ex, (Vx, H), dtype=jnp.float32)
    tab_y = jax.random.normal(k_ey, (Vy, H), dtype=jnp.float32)
    bound = 1.0 / (in_dim ** 0.5)
    W_t = jax.random.uniform(k_w, (in_dim, H), minval=-bound, maxval=bound,
                             dtype=jnp.float32)   # already transposed: [in, out]
    b = jax.random.uniform(k_b, (H,), minval=-bound, maxval=bound,
                           dtype=jnp.float32)

    # src: [B, S, 3] = (x_id, y_id, extra scalar feature), stored as float32.
    ids_x = jax.random.randint(k_ix, (B, S), 0, Vx).astype(jnp.float32)
    ids_y = jax.random.randint(k_iy, (B, S), 0, Vy).astype(jnp.float32)
    feat = jax.random.normal(k_f, (B, S), dtype=jnp.float32)
    src = jnp.stack([ids_x, ids_y, feat], axis=-1)   # [B, S, 3]

    fwd = jax.jit(encoder_forward)
    out = jax.block_until_ready(fwd(src, tab_x, tab_y, W_t, b))

    ref = encoder_reference(src, tab_x, tab_y, W_t, b)
    assert out.shape == (B, S, H)
    # Tolerance allows for MXU f32-emulation / reassociation of the folded form.
    assert jnp.allclose(out, ref, rtol=1e-3, atol=1e-3), "mismatch vs JAX reference"

    print("KERNEL_OK")
</pallas_src>

<mosaic_0001>
module attributes {stable_mosaic.version = 11 : i64} {
  func.func @encoder_kernel(%arg0: i32, %arg1: memref<3x128xf32, #tpu.memory_space<vmem>>, %arg2: memref<32x32xf32, #tpu.memory_space<vmem>>, %arg3: memref<128x32xf32, #tpu.memory_space<vmem>>) attributes {dimension_semantics = [#tpu.dimension_semantics<parallel>], iteration_bounds = array<i64: 1>, scalar_prefetch = 0 : i64, scratch_operands = 0 : i64, tpu.core_type = #tpu.core_type<tc>, window_params = [{transform_indices = @transform_0, window_bounds = array<i64: 3, 128>}, {pipeline_mode = #tpu.pipeline_mode<synchronous>, transform_indices = @transform_1, window_bounds = array<i64: 32, 32>}, {transform_indices = @transform_2, window_bounds = array<i64: 128, 32>}]} {
    %c0 = arith.constant 0 : index
    %c0_0 = arith.constant 0 : index
    %0 = vector.load %arg1[%c0, %c0_0] : memref<3x128xf32, #tpu.memory_space<vmem>>, vector<1x128xf32>
    %1 = arith.fptosi %0 : vector<1x128xf32> to vector<1x128xi32>
    %c1 = arith.constant 1 : index
    %c0_1 = arith.constant 0 : index
    %2 = vector.load %arg1[%c1, %c0_1] : memref<3x128xf32, #tpu.memory_space<vmem>>, vector<1x128xf32>
    %3 = arith.fptosi %2 : vector<1x128xf32> to vector<1x128xi32>
    %c2 = arith.constant 2 : index
    %c0_2 = arith.constant 0 : index
    %4 = vector.load %arg1[%c2, %c0_2] : memref<3x128xf32, #tpu.memory_space<vmem>>, vector<1x128xf32>
    %5 = tpu.iota {dimensions = array<i32: 0>} : vector<32x128xi32>
    %6 = vector.broadcast %1 : vector<1x128xi32> to vector<32x128xi32>
    %7 = arith.cmpi eq, %5, %6 : vector<32x128xi32>
    %c11_i32 = arith.constant 11 : i32
    %8 = vector.broadcast %c11_i32 : i32 to vector<1x128xi32>
    %9 = arith.addi %3, %8 : vector<1x128xi32>
    %10 = vector.broadcast %9 : vector<1x128xi32> to vector<32x128xi32>
    %11 = arith.cmpi eq, %5, %10 : vector<32x128xi32>
    %12 = arith.ori %7, %11 : vector<32x128xi1>
    %13 = arith.extui %12 : vector<32x128xi1> to vector<32x128xi32>
    %14 = arith.sitofp %13 : vector<32x128xi32> to vector<32x128xf32>
    %c24_i32 = arith.constant 24 : i32
    %15 = vector.broadcast %c24_i32 : i32 to vector<32x128xi32>
    %16 = arith.cmpi eq, %5, %15 : vector<32x128xi32>
    %17 = vector.shape_cast %4 : vector<1x128xf32> to vector<1x128xf32>
    %18 = vector.broadcast %17 : vector<1x128xf32> to vector<32x128xf32>
    %19 = arith.select %16, %18, %14 : vector<32x128xi1>, vector<32x128xf32>
    %c25_i32 = arith.constant 25 : i32
    %20 = vector.broadcast %c25_i32 : i32 to vector<32x128xi32>
    %21 = arith.cmpi eq, %5, %20 : vector<32x128xi32>
    %cst = arith.constant 1.000000e+00 : f32
    %22 = vector.broadcast %cst : f32 to vector<32x128xf32>
    %23 = arith.select %21, %22, %19 : vector<32x128xi1>, vector<32x128xf32>
    %c0_3 = arith.constant 0 : index
    %c0_4 = arith.constant 0 : index
    %24 = vector.load %arg2[%c0_3, %c0_4] : memref<32x32xf32, #tpu.memory_space<vmem>>, vector<32x32xf32>
    %cst_5 = arith.constant dense<0.000000e+00> : vector<128x32xf32>
    %25 = tpu.matmul %23, %24, %cst_5 {dimension_numbers = #tpu.dot_dimension_numbers<[0], [0], [1], [1], [0, 1, 1, 1], [], []>, precision = #tpu.contract_precision<fp32>} : vector<32x128xf32>, vector<32x32xf32>, vector<128x32xf32> -> vector<128x32xf32>
    %c0_6 = arith.constant 0 : index
    %c0_7 = arith.constant 0 : index
    %26 = vector.load %arg3[%c0_6, %c0_7] : memref<128x32xf32, #tpu.memory_space<vmem>>, vector<128x32xf32>
    tpu.vector_store %arg3[%c0_6, %c0_7], %25 {strides = array<i32>} : memref<128x32xf32, #tpu.memory_space<vmem>>, vector<128x32xf32>,
    return
  }
  func.func @transform_0(%arg0: i32) -> (i32, i32) {
    %c0_i32 = arith.constant 0 : i32
    %c0_i32_0 = arith.constant 0 : i32
    return %c0_i32, %arg0 : i32, i32
  }
  func.func @transform_1(%arg0: i32) -> (i32, i32) {
    %c0_i32 = arith.constant 0 : i32
    %c0_i32_0 = arith.constant 0 : i32
    %c0_i32_1 = arith.constant 0 : i32
    return %c0_i32, %c0_i32_0 : i32, i32
  }
  func.func @transform_2(%arg0: i32) -> (i32, i32) {
    %c0_i32 = arith.constant 0 : i32
    %c0_i32_0 = arith.constant 0 : i32
    return %arg0, %c0_i32 : i32, i32
  }
}

</mosaic_0001>

<llo_original>
// kernel: encoder_forward.1
$region0: #{encoder_forward.1}
  #allocation0 [shape = 'u32[]', space=smem, size = 0x4, offset = 0x4, fixed_abs, tag = 'smem constant byte address 0x4 - core index']
  #allocation1 [shape = 'u32[144,128]{1,0:T(1,128)}', space=vmem, size = 0x12000, scoped, tag = 'internal scratch']
  %s0 = inlined_call_operand.vmem [shape: f32[3,128], index: 0, kind: input, shape index: {}]
  %s1 = inlined_call_operand.vmem [shape: f32[32,32], index: 1, kind: input, shape index: {}]
  %s2 = inlined_call_operand.vmem [shape: f32[128,32], index: 2, kind: output, shape index: {}]
  %s3 = sld [smem:[#allocation0]]
  $region18: #{encoder_forward.1} parent=0
    _
  %s5 = ssub.s32 1, %s3
  %s6 = scalar_select 0, %s5, %s3
  // Predicated region
  $region2: #{encoder_forward.1} parent=0 // pred_check
    _
  $region3: #{encoder_forward.1} parent=0 // pred_check_branch
    %8 = sbr.rel (0) target = $region5
  $region4: #{encoder_forward.1} parent=0 // pred_region
    _
  $region5: #{encoder_forward.1} parent=0 // pred_fallthru
    _
  // Predicated region
  $region6: #{encoder_forward.1} parent=0 // pred_check
    _
  $region7: #{encoder_forward.1} parent=0 // pred_check_branch
    %10 = sbr.rel (0) target = $region9
  $region8: #{encoder_forward.1} parent=0 // pred_region
    _
  $region9: #{encoder_forward.1} parent=0 // pred_fallthru
    _
  %v11 = vld [vmem:[%s0] sm:$0x1]
  %v12 = vcvt.f32.s32.to.zero.pseudo %v11
  %v13 = vld [vmem:[%s0 + $0x1] sm:$0x1]
  %v14 = vcvt.f32.s32.to.zero.pseudo %v13
  %v15 = vld [vmem:[%s0 + $0x2] sm:$0x1]
  %v16 = vlaneseq
  %v17 = vshrl.u32 %v16, 7
  %v18 = vadd.s32 %v17, 8
  %v19 = vadd.s32 %v17, 16
  %v20 = vadd.s32 %v17, 24
  %v21 = vlaneseq
  %v22 = vshrl.u32 %v21, 7
  %v23 = vsub.s32 0, %v22
  %v24 = vrot.slane %v12, %v23
  %vm25 = vcmp.eq.s32.totalorder %v17, %v24
  %vm26 = vcmp.eq.s32.totalorder %v18, %v24
  %vm27 = vcmp.eq.s32.totalorder %v19, %v24
  %vm28 = vcmp.eq.s32.totalorder %v20, %v24
  %v29 = vadd.s32 %v14, 11
  %v30 = vlaneseq
  %v31 = vshrl.u32 %v30, 7
  %v32 = vsub.s32 0, %v31
  %v33 = vrot.slane %v29, %v32
  %vm34 = vcmp.eq.s32.totalorder %v17, %v33
  %vm35 = vcmp.eq.s32.totalorder %v18, %v33
  %vm36 = vcmp.eq.s32.totalorder %v19, %v33
  %vm37 = vcmp.eq.s32.totalorder %v20, %v33
  %vm38 = vmor %vm25, %vm34
  %vm39 = vmor %vm26, %vm35
  %vm40 = vmor %vm27, %vm36
  %vm41 = vmor %vm28, %vm37
  %v42 = vsel %vm38, 1, 0
  %v43 = vsel %vm39, 1, 0
  %v44 = vsel %vm40, 1, 0
  %v45 = vsel %vm41, 1, 0
  %v46 = vcvt.s32.f32 %v42
  %v47 = vcvt.s32.f32 %v43
  %v48 = vcvt.s32.f32 %v44
  %v49 = vcvt.s32.f32 %v45
  %vm50 = vcmp.eq.s32.totalorder %v17, 24
  %vm51 = vcmp.eq.s32.totalorder %v18, 24
  %vm52 = vcmp.eq.s32.totalorder %v19, 24
  %vm53 = vcmp.eq.s32.totalorder %v20, 24
  %v54 = vlaneseq
  %v55 = vshrl.u32 %v54, 7
  %v56 = vsub.s32 0, %v55
  %v57 = vrot.slane %v15, %v56
  %v58 = vsel %vm50, %v57, %v46
  %v59 = vsel %vm51, %v57, %v47
  %v60 = vsel %vm52, %v57, %v48
  %v61 = vsel %vm53, %v57, %v49
  %vm62 = vcmp.eq.s32.totalorder %v17, 25
  %vm63 = vcmp.eq.s32.totalorder %v18, 25
  %vm64 = vcmp.eq.s32.totalorder %v19, 25
  %vm65 = vcmp.eq.s32.totalorder %v20, 25
  %v66 = vsel %vm62, 1.0, %v58
  %v67 = vsel %vm63, 1.0, %v59
  %v68 = vsel %vm64, 1.0, %v60
  %v69 = vsel %vm65, 1.0, %v61
  %v70 = vld [vmem:[%s1] sm:$0xff]
  %v71 = vld [vmem:[%s1 + $0x8] sm:$0xff]
  %v72 = vld [vmem:[%s1 + $0x10] sm:$0xff]
  %v73 = vld [vmem:[%s1 + $0x18] sm:$0xff]
  %74 = vxpose.xlu0.b32.start [1/16] %v66, 128
  %75 = vxpose.xlu0.b32.cont [2/16] %v67, 128
  %76 = vxpose.xlu0.b32.cont [3/16] %v68, 128
  %77 = vxpose.xlu0.b32.cont [4/16] %v69, 128
  %78 = vxpose.xlu0.b32.cont [5/16] 0.0, 128
  %79 = vxpose.xlu0.b32.cont [6/16] 0.0, 128
  %80 = vxpose.xlu0.b32.cont [7/16] 0.0, 128
  %81 = vxpose.xlu0.b32.cont [8/16] 0.0, 128
  %82 = vxpose.xlu0.b32.cont [9/16] 0.0, 128
  %83 = vxpose.xlu0.b32.cont [10/16] 0.0, 128
  %84 = vxpose.xlu0.b32.cont [11/16] 0.0, 128
  %85 = vxpose.xlu0.b32.cont [12/16] 0.0, 128
  %86 = vxpose.xlu0.b32.cont [13/16] 0.0, 128
  %87 = vxpose.xlu0.b32.cont [14/16] 0.0, 128
  %88 = vxpose.xlu0.b32.cont [15/16] 0.0, 128
  %89 = vxpose.xlu0.b32.end [16/16] 0.0, 128
  %v90 = vpop.trf.xlu0
  %v91 = vpop.trf.xlu0
  %v92 = vpop.trf.xlu0
  %v93 = vpop.trf.xlu0
  %v94 = vpop.trf.xlu0
  %v95 = vpop.trf.xlu0
  %v96 = vpop.trf.xlu0
  %v97 = vpop.trf.xlu0
  %v98 = vpop.trf.xlu0
  %v99 = vpop.trf.xlu0
  %v100 = vpop.trf.xlu0
  %v101 = vpop.trf.xlu0
  %v102 = vpop.trf.xlu0
  %v103 = vpop.trf.xlu0
  %v104 = vpop.trf.xlu0
  %v105 = vpop.trf.xlu0
  %vm106 = vcmask 261120
  %v108 = vsel %vm106, %v90, 0
  %v111 = vsel %vm106, %v91, 0
  %v114 = vsel %vm106, %v92, 0
  %v117 = vsel %vm106, %v93, 0
  %v120 = vsel %vm106, %v94, 0
  %v123 = vsel %vm106, %v95, 0
  %v126 = vsel %vm106, %v96, 0
  %v129 = vsel %vm106, %v97, 0
  %v132 = vsel %vm106, %v98, 0
  %v135 = vsel %vm106, %v99, 0
  %v138 = vsel %vm106, %v100, 0
  %v141 = vsel %vm106, %v101, 0
  %v144 = vsel %vm106, %v102, 0
  %v147 = vsel %vm106, %v103, 0
  %v150 = vsel %vm106, %v104, 0
  %v153 = vsel %vm106, %v105, 0
  %155 = vmatprep.subr.mxu0 0.0
  %v156 = vand.u32 %v70, 4294901760
  %157 = vmatpush1.msra.mxu0 %v156
  %158 = vmatprep.subr.mxu0 0.0
  %v159 = vand.u32 %v71, 4294901760
  %160 = vmatpush1.msra.mxu0 %v159
  %161 = vmatprep.subr.mxu0 0.0
  %v162 = vand.u32 %v72, 4294901760
  %163 = vmatpush1.msra.mxu0 %v162
  %164 = vmatprep.subr.mxu0 0.0
  %v165 = vand.u32 %v73, 4294901760
  %166 = vmatpush1.msra.mxu0 %v165
  %167 = vmatprep.subr.mxu0 0.0
  %168 = vmatpush1.msra.mxu0 0.0
  %169 = vmatprep.subr.mxu0 0.0
  %170 = vmatpush1.msra.mxu0 0.0
  %171 = vmatprep.subr.mxu0 0.0
  %172 = vmatpush1.msra.mxu0 0.0
  %173 = vmatprep.subr.mxu0 0.0
  %174 = vmatpush1.msra.mxu0 0.0
  %175 = vmatprep.subr.mxu0 0.0
  %176 = vmatpush1.msra.mxu0 0.0
  %177 = vmatprep.subr.mxu0 0.0
  %178 = vmatpush1.msra.mxu0 0.0
  %179 = vmatprep.subr.mxu0 0.0
  %180 = vmatpush1.msra.mxu0 0.0
  %181 = vmatprep.subr.mxu0 0.0
  %182 = vmatpush1.msra.mxu0 0.0
  %183 = vmatprep.subr.mxu0 0.0
  %184 = vmatpush1.msra.mxu0 0.0
  %185 = vmatprep.subr.mxu0 0.0
  %186 = vmatpush1.msra.mxu0 0.0
  %187 = vmatprep.subr.mxu0 0.0
  %188 = vmatpush1.msra.mxu0 0.0
  %189 = vmatprep.subr.mxu0 0.0
  %190 = vmatpush1.msra.mxu0 0.0
  %191 = vmatprep.subr.mxu0 0.0
  %192 = vmatpush1.msra.mxu0 0.0
  %193 = vmatprep.subr.mxu0 0.0
  %194 = vmatpush1.msra.mxu0 0.0
  %195 = vmatprep.subr.mxu0 0.0
  %196 = vmatpush1.msra.mxu0 0.0
  %197 = vmatprep.subr.mxu0 0.0
  %198 = vmatpush1.msra.mxu0 0.0
  %199 = vmatprep.subr.mxu0 0.0
  %200 = vmatpush1.msra.mxu0 0.0
  %201 = vmatprep.subr.mxu0 0.0
  %202 = vmatpush1.msra.mxu0 0.0
  %203 = vmatprep.subr.mxu0 0.0
  %204 = vmatpush1.msra.mxu0 0.0
  %205 = vmatprep.subr.mxu0 0.0
  %206 = vmatpush1.msra.mxu0 0.0
  %207 = vmatprep.subr.mxu0 0.0
  %208 = vmatpush1.msra.mxu0 0.0
  %209 = vmatprep.subr.mxu0 0.0
  %210 = vmatpush1.msra.mxu0 0.0
  %211 = vmatprep.subr.mxu0 0.0
  %212 = vmatpush1.msra.mxu0 0.0
  %213 = vmatprep.subr.mxu0 0.0
  %214 = vmatpush1.msra.mxu0 0.0
  %215 = vmatprep.subr.mxu0 0.0
  %216 = vmatpush1.msra.mxu0 0.0
  %217 = vmatprep.subr.mxu0 0.0
  %218 = vmatpush1.msra.mxu0 0.0
  %219 = vmatprep.subr.mxu0 0.0
  %220 = vmatpush1.msra.mxu0 0.0
  %221 = vmatprep.subr.mxu0 0.0
  %222 = vmatpush1.msra.mxu0 0.0
  %223 = vmatprep.mubr.f32.mxu0 0.0
  %v224 = vand.u32 %v108, 4294901760
  %v225 = vsub.f32 %v108, %v224
  %v226 = vand.u32 %v225, 4294901760
  %v227 = vsub.f32 %v225, %v226
  %v228 = vand.u32 %v227, 4294901760
  %229 = vmatmul.mubr.f32.gmra.mrb[0].mxu0 %v228
  %v230 = vpop.f32.mrb[0].mxu0
  %v231 = vadd.f32 0.0, %v230
  %v232 = vpop.f32.mrb[0].mxu0
  %233 = vmatprep.mubr.f32.mxu0 0.0
  %v234 = vand.u32 %v111, 4294901760
  %v235 = vsub.f32 %v111, %v234
  %v236 = vand.u32 %v235, 4294901760
  %v237 = vsub.f32 %v235, %v236
  %v238 = vand.u32 %v237, 4294901760
  %239 = vmatmul.mubr.f32.gmra.mrb[0].mxu0 %v238
  %v240 = vpop.f32.mrb[0].mxu0
  %v241 = vadd.f32 0.0, %v240
  %v242 = vpop.f32.mrb[0].mxu0
  %243 = vmatprep.mubr.f32.mxu0 0.0
  %v244 = vand.u32 %v114, 4294901760
  %v245 = vsub.f32 %v114, %v244
  %v246 = vand.u32 %v245, 4294901760
  %v247 = vsub.f32 %v245, %v246
  %v248 = vand.u32 %v247, 4294901760
  %249 = vmatmul.mubr.f32.gmra.mrb[0].mxu0 %v248
  %v250 = vpop.f32.mrb[0].mxu0
  %v251 = vadd.f32 0.0, %v250
  %v252 = vpop.f32.mrb[0].mxu0
  %253 = vmatprep.mubr.f32.mxu0 0.0
  %v254 = vand.u32 %v117, 4294901760
  %v255 = vsub.f32 %v117, %v254
  %v256 = vand.u32 %v255, 4294901760
  %v257 = vsub.f32 %v255, %v256
  %v258 = vand.u32 %v257, 4294901760
  %259 = vmatmul.mubr.f32.gmra.mrb[0].mxu0 %v258
  %v260 = vpop.f32.mrb[0].mxu0
  %v261 = vadd.f32 0.0, %v260
  %v262 = vpop.f32.mrb[0].mxu0
  %263 = vmatprep.mubr.f32.mxu0 0.0
  %v264 = vand.u32 %v120, 4294901760
  %v265 = vsub.f32 %v120, %v264
  %v266 = vand.u32 %v265, 4294901760
  %v267 = vsub.f32 %v265, %v266
  %v268 = vand.u32 %v267, 4294901760
  %269 = vmatmul.mubr.f32.gmra.mrb[0].mxu0 %v268
  %v270 = vpop.f32.mrb[0].mxu0
  %v271 = vadd.f32 0.0, %v270
  %v272 = vpop.f32.mrb[0].mxu0
  %273 = vmatprep.mubr.f32.mxu0 0.0
  %v274 = vand.u32 %v123, 4294901760
  %v275 = vsub.f32 %v123, %v274
  %v276 = vand.u32 %v275, 4294901760
  %v277 = vsub.f32 %v275, %v276
  %v278 = vand.u32 %v277, 4294901760
  %279 = vmatmul.mubr.f32.gmra.mrb[0].mxu0 %v278
  %v280 = vpop.f32.mrb[0].mxu0
  %v281 = vadd.f32 0.0, %v280
  %v282 = vpop.f32.mrb[0].mxu0
  %283 = vmatprep.mubr.f32.mxu0 0.0
  %v284 = vand.u32 %v126, 4294901760
  %v285 = vsub.f32 %v126, %v284
  %v286 = vand.u32 %v285, 4294901760
  %v287 = vsub.f32 %v285, %v286
  %v288 = vand.u32 %v287, 4294901760
  %289 = vmatmul.mubr.f32.gmra.mrb[0].mxu0 %v288
  %v290 = vpop.f32.mrb[0].mxu0
  %v291 = vadd.f32 0.0, %v290
  %v292 = vpop.f32.mrb[0].mxu0
  %293 = vmatprep.mubr.f32.mxu0 0.0
  %v294 = vand.u32 %v129, 4294901760
  %v295 = vsub.f32 %v129, %v294
  %v296 = vand.u32 %v295, 4294901760
  %v297 = vsub.f32 %v295, %v296
  %v298 = vand.u32 %v297, 4294901760
  %299 = vmatmul.mubr.f32.gmra.mrb[0].mxu0 %v298
  %v300 = vpop.f32.mrb[0].mxu0
  %v301 = vadd.f32 0.0, %v300
  %v302 = vpop.f32.mrb[0].mxu0
  %303 = vmatprep.mubr.f32.mxu0 0.0
  %v304 = vand.u32 %v132, 4294901760
  %v305 = vsub.f32 %v132, %v304
  %v306 = vand.u32 %v305, 4294901760
  %v307 = vsub.f32 %v305, %v306
  %v308 = vand.u32 %v307, 4294901760
  %309 = vmatmul.mubr.f32.gmra.mrb[0].mxu0 %v308
  %v310 = vpop.f32.mrb[0].mxu0
  %v311 = vadd.f32 0.0, %v310
  %v312 = vpop.f32.mrb[0].mxu0
  %313 = vmatprep.mubr.f32.mxu0 0.0
  %v314 = vand.u32 %v135, 4294901760
  %v315 = vsub.f32 %v135, %v314
  %v316 = vand.u32 %v315, 4294901760
  %v317 = vsub.f32 %v315, %v316
  %v318 = vand.u32 %v317, 4294901760
  %319 = vmatmul.mubr.f32.gmra.mrb[0].mxu0 %v318
  %v320 = vpop.f32.mrb[0].mxu0
  %v321 = vadd.f32 0.0, %v320
  %v322 = vpop.f32.mrb[0].mxu0
  %323 = vmatprep.mubr.f32.mxu0 0.0
  %v324 = vand.u32 %v138, 4294901760
  %v325 = vsub.f32 %v138, %v324
  %v326 = vand.u32 %v325, 4294901760
  %v327 = vsub.f32 %v325, %v326
  %v328 = vand.u32 %v327, 4294901760
  %329 = vmatmul.mubr.f32.gmra.mrb[0].mxu0 %v328
  %v330 = vpop.f32.mrb[0].mxu0
  %v331 = vadd.f32 0.0, %v330
  %v332 = vpop.f32.mrb[0].mxu0
  %333 = vmatprep.mubr.f32.mxu0 0.0
  %v334 = vand.u32 %v141, 4294901760
  %v335 = vsub.f32 %v141, %v334
  %v336 = vand.u32 %v335, 4294901760
  %v337 = vsub.f32 %v335, %v336
  %v338 = vand.u32 %v337, 4294901760
  %339 = vmatmul.mubr.f32.gmra.mrb[0].mxu0 %v338
  %v340 = vpop.f32.mrb[0].mxu0
  %v341 = vadd.f32 0.0, %v340
  %v342 = vpop.f32.mrb[0].mxu0
  %343 = vmatprep.mubr.f32.mxu0 0.0
  %v344 = vand.u32 %v144, 4294901760
  %v345 = vsub.f32 %v144, %v344
  %v346 = vand.u32 %v345, 4294901760
  %v347 = vsub.f32 %v345, %v346
  %v348 = vand.u32 %v347, 4294901760
  %349 = vmatmul.mubr.f32.gmra.mrb[0].mxu0 %v348
  %v350 = vpop.f32.mrb[0].mxu0
  %v351 = vadd.f32 0.0, %v350
  %v352 = vpop.f32.mrb[0].mxu0
  %353 = vmatprep.mubr.f32.mxu0 0.0
  %v354 = vand.u32 %v147, 4294901760
  %v355 = vsub.f32 %v147, %v354
  %v356 = vand.u32 %v355, 4294901760
  %v357 = vsub.f32 %v355, %v356
  %v358 = vand.u32 %v357, 4294901760
  %359 = vmatmul.mubr.f32.gmra.mrb[0].mxu0 %v358
  %v360 = vpop.f32.mrb[0].mxu0
  %v361 = vadd.f32 0.0, %v360
  %v362 = vpop.f32.mrb[0].mxu0
  %363 = vmatprep.mubr.f32.mxu0 0.0
  %v364 = vand.u32 %v150, 4294901760
  %v365 = vsub.f32 %v150, %v364
  %v366 = vand.u32 %v365, 4294901760
  %v367 = vsub.f32 %v365, %v366
  %v368 = vand.u32 %v367, 4294901760
  %369 = vmatmul.mubr.f32.gmra.mrb[0].mxu0 %v368
  %v370 = vpop.f32.mrb[0].mxu0
  %v371 = vadd.f32 0.0, %v370
  %v372 = vpop.f32.mrb[0].mxu0
  %373 = vmatprep.mubr.f32.mxu0 0.0
  %v374 = vand.u32 %v153, 4294901760
  %v375 = vsub.f32 %v153, %v374
  %v376 = vand.u32 %v375, 4294901760
  %v377 = vsub.f32 %v375, %v376
  %v378 = vand.u32 %v377, 4294901760
  %379 = vmatmul.mubr.f32.gmra.mrb[0].mxu0 %v378
  %v380 = vpop.f32.mrb[0].mxu0
  %v381 = vadd.f32 0.0, %v380
  %v382 = vpop.f32.mrb[0].mxu0
  %383 = vdwg.mxu0
  %384 = vmatprep.subr.mxu0 0.0
  %v385 = vand.u32 %v70, 4294901760
  %v386 = vsub.f32 %v70, %v385
  %v387 = vand.u32 %v386, 4294901760
  %v388 = vsub.f32 %v386, %v387
  %v389 = vand.u32 %v388, 4294901760
  %390 = vmatpush1.msra.mxu0 %v389
  %391 = vmatprep.subr.mxu0 0.0
  %v392 = vand.u32 %v71, 4294901760
  %v393 = vsub.f32 %v71, %v392
  %v394 = vand.u32 %v393, 4294901760
  %v395 = vsub.f32 %v393, %v394
  %v396 = vand.u32 %v395, 4294901760
  %397 = vmatpush1.msra.mxu0 %v396
  %398 = vmatprep.subr.mxu0 0.0
  %v399 = vand.u32 %v72, 4294901760
  %v400 = vsub.f32 %v72, %v399
  %v401 = vand.u32 %v400, 4294901760
  %v402 = vsub.f32 %v400, %v401
  %v403 = vand.u32 %v402, 4294901760
  %404 = vmatpush1.msra.mxu0 %v403
  %405 = vmatprep.subr.mxu0 0.0
  %v406 = vand.u32 %v73, 4294901760
  %v407 = vsub.f32 %v73, %v406
  %v408 = vand.u32 %v407, 4294901760
  %v409 = vsub.f32 %v407, %v408
  %v410 = vand.u32 %v409, 4294901760
  %411 = vmatpush1.msra.mxu0 %v410
  %412 = vmatprep.subr.mxu0 0.0
  %413 = vmatpush1.msra.mxu0 0.0
  %414 = vmatprep.subr.mxu0 0.0
  %415 = vmatpush1.msra.mxu0 0.0
  %416 = vmatprep.subr.mxu0 0.0
  %417 = vmatpush1.msra.mxu0 0.0
  %418 = vmatprep.subr.mxu0 0.0
  %419 = vmatpush1.msra.mxu0 0.0
  %420 = vmatprep.subr.mxu0 0.0
  %421 = vmatpush1.msra.mxu0 0.0
  %422 = vmatprep.subr.mxu0 0.0
  %423 = vmatpush1.msra.mxu0 0.0
  %424 = vmatprep.subr.mxu0 0.0
  %425 = vmatpush1.msra.mxu0 0.0
  %426 = vmatprep.subr.mxu0 0.0
  %427 = vmatpush1.msra.mxu0 0.0
  %428 = vmatprep.subr.mxu0 0.0
  %429 = vmatpush1.msra.mxu0 0.0
  %430 = vmatprep.subr.mxu0 0.0
  %431 = vmatpush1.msra.mxu0 0.0
  %432 = vmatprep.subr.mxu0 0.0
  %433 = vmatpush1.msra.mxu0 0.0
  %434 = vmatprep.subr.mxu0 0.0
  %435 = vmatpush1.msra.mxu0 0.0
  %436 = vmatprep.subr.mxu0 0.0
  %437 = vmatpush1.msra.mxu0 0.0
  %438 = vmatprep.subr.mxu0 0.0
  %439 = vmatpush1.msra.mxu0 0.0
  %440 = vmatprep.subr.mxu0 0.0
  %441 = vmatpush1.msra.mxu0 0.0
  %442 = vmatprep.subr.mxu0 0.0
  %443 = vmatpush1.msra.mxu0 0.0
  %444 = vmatprep.subr.mxu0 0.0
  %445 = vmatpush1.msra.mxu0 0.0
  %446 = vmatprep.subr.mxu0 0.0
  %447 = vmatpush1.msra.mxu0 0.0
  %448 = vmatprep.subr.mxu0 0.0
  %449 = vmatpush1.msra.mxu0 0.0
  %450 = vmatprep.subr.mxu0 0.0
  %451 = vmatpush1.msra.mxu0 0.0
  %452 = vmatprep.subr.mxu0 0.0
  %453 = vmatpush1.msra.mxu0 0.0
  %454 = vmatprep.subr.mxu0 0.0
  %455 = vmatpush1.msra.mxu0 0.0
  %456 = vmatprep.subr.mxu0 0.0
  %457 = vmatpush1.msra.mxu0 0.0
  %458 = vmatprep.subr.mxu0 0.0
  %459 = vmatpush1.msra.mxu0 0.0
  %460 = vmatprep.subr.mxu0 0.0
  %461 = vmatpush1.msra.mxu0 0.0
  %462 = vmatprep.subr.mxu0 0.0
  %463 = vmatpush1.msra.mxu0 0.0
  %464 = vmatprep.subr.mxu0 0.0
  %465 = vmatpush1.msra.mxu0 0.0
  %466 = vmatprep.subr.mxu0 0.0
  %467 = vmatpush1.msra.mxu0 0.0
  %468 = vmatprep.mubr.f32.mxu0 0.0
  %v469 = vand.u32 %v108, 4294901760
  %470 = vmatmul.mubr.f32.gmra.mrb[0].mxu0 %v469
  %v471 = vpop.f32.mrb[0].mxu0
  %v472 = vadd.f32 %v231, %v471
  %v473 = vpop.f32.mrb[0].mxu0
  %474 = vmatprep.mubr.f32.mxu0 0.0
  %v475 = vand.u32 %v111, 4294901760
  %476 = vmatmul.mubr.f32.gmra.mrb[0].mxu0 %v475
  %v477 = vpop.f32.mrb[0].mxu0
  %v478 = vadd.f32 %v241, %v477
  %v479 = vpop.f32.mrb[0].mxu0
  %480 = vmatprep.mubr.f32.mxu0 0.0
  %v481 = vand.u32 %v114, 4294901760
  %482 = vmatmul.mubr.f32.gmra.mrb[0].mxu0 %v481
  %v483 = vpop.f32.mrb[0].mxu0
  %v484 = vadd.f32 %v251, %v483
  %v485 = vpop.f32.mrb[0].mxu0
  %486 = vmatprep.mubr.f32.mxu0 0.0
  %v487 = vand.u32 %v117, 4294901760
  %488 = vmatmul.mubr.f32.gmra.mrb[0].mxu0 %v487
  %v489 = vpop.f32.mrb[0].mxu0
  %v490 = vadd.f32 %v261, %v489
  %v491 = vpop.f32.mrb[0].mxu0
  %492 = vmatprep.mubr.f32.mxu0 0.0
  %v493 = vand.u32 %v120, 4294901760
  %494 = vmatmul.mubr.f32.gmra.mrb[0].mxu0 %v493
  %v495 = vpop.f32.mrb[0].mxu0
  %v496 = vadd.f32 %v271, %v495
  %v497 = vpop.f32.mrb[0].mxu0
  %498 = vmatprep.mubr.f32.mxu0 0.0
  %v499 = vand.u32 %v123, 4294901760
  %500 = vmatmul.mubr.f32.gmra.mrb[0].mxu0 %v499
  %v501 = vpop.f32.mrb[0].mxu0
  %v502 = vadd.f32 %v281, %v501
  %v503 = vpop.f32.mrb[0].mxu0
  %504 = vmatprep.mubr.f32.mxu0 0.0
  %v505 = vand.u32 %v126, 4294901760
  %506 = vmatmul.mubr.f32.gmra.mrb[0].mxu0 %v505
  %v507 = vpop.f32.mrb[0].mxu0
  %v508 = vadd.f32 %v291, %v507
  %v509 = vpop.f32.mrb[0].mxu0
  %510 = vmatprep.mubr.f32.mxu0 0.0
  %v511 = vand.u32 %v129, 4294901760
  %512 = vmatmul.mubr.f32.gmra.mrb[0].mxu0 %v511
  %v513 = vpop.f32.mrb[0].mxu0
  %v514 = vadd.f32 %v301, %v513
  %v515 = vpop.f32.mrb[0].mxu0
  %516 = vmatprep.mubr.f32.mxu0 0.0
  %v517 = vand.u32 %v132, 4294901760
  %518 = vmatmul.mubr.f32.gmra.mrb[0].mxu0 %v517
  %v519 = vpop.f32.mrb[0].mxu0
  %v520 = vadd.f32 %v311, %v519
  %v521 = vpop.f32.mrb[0].mxu0
  %522 = vmatprep.mubr.f32.mxu0 0.0
  %v523 = vand.u32 %v135, 4294901760
  %524 = vmatmul.mubr.f32.gmra.mrb[0].mxu0 %v523
  %v525 = vpop.f32.mrb[0].mxu0
  %v526 = vadd.f32 %v321, %v525
  %v527 = vpop.f32.mrb[0].mxu0
  %528 = vmatprep.mubr.f32.mxu0 0.0
  %v529 = vand.u32 %v138, 4294901760
  %530 = vmatmul.mubr.f32.gmra.mrb[0].mxu0 %v529
  %v531 = vpop.f32.mrb[0].mxu0
  %v532 = vadd.f32 %v331, %v531
  %v533 = vpop.f32.mrb[0].mxu0
  %534 = vmatprep.mubr.f32.mxu0 0.0
  %v535 = vand.u32 %v141, 4294901760
  %536 = vmatmul.mubr.f32.gmra.mrb[0].mxu0 %v535
  %v537 = vpop.f32.mrb[0].mxu0
  %v538 = vadd.f32 %v341, %v537
  %v539 = vpop.f32.mrb[0].mxu0
  %540 = vmatprep.mubr.f32.mxu0 0.0
  %v541 = vand.u32 %v144, 4294901760
  %542 = vmatmul.mubr.f32.gmra.mrb[0].mxu0 %v541
  %v543 = vpop.f32.mrb[0].mxu0
  %v544 = vadd.f32 %v351, %v543
  %v545 = vpop.f32.mrb[0].mxu0
  %546 = vmatprep.mubr.f32.mxu0 0.0
  %v547 = vand.u32 %v147, 4294901760
  %548 = vmatmul.mubr.f32.gmra.mrb[0].mxu0 %v547
  %v549 = vpop.f32.mrb[0].mxu0
  %v550 = vadd.f32 %v361, %v549
  %v551 = vpop.f32.mrb[0].mxu0
  %552 = vmatprep.mubr.f32.mxu0 0.0
  %v553 = vand.u32 %v150, 4294901760
  %554 = vmatmul.mubr.f32.gmra.mrb[0].mxu0 %v553
  %v555 = vpop.f32.mrb[0].mxu0
  %v556 = vadd.f32 %v371, %v555
  %v557 = vpop.f32.mrb[0].mxu0
  %558 = vmatprep.mubr.f32.mxu0 0.0
  %v559 = vand.u32 %v153, 4294901760
  %560 = vmatmul.mubr.f32.gmra.mrb[0].mxu0 %v559
  %v561 = vpop.f32.mrb[0].mxu0
  %v562 = vadd.f32 %v381, %v561
  %v563 = vpop.f32.mrb[0].mxu0
  %564 = vdwg.mxu0
  %565 = vmatprep.subr.mxu0 0.0
  %v566 = vand.u32 %v70, 4294901760
  %v567 = vsub.f32 %v70, %v566
  %568 = vmatpush1.msra.mxu0 %v567
  %569 = vmatprep.subr.mxu0 0.0
  %v570 = vand.u32 %v71, 4294901760
  %v571 = vsub.f32 %v71, %v570
  %572 = vmatpush1.msra.mxu0 %v571
  %573 = vmatprep.subr.mxu0 0.0
  %v574 = vand.u32 %v72, 4294901760
  %v575 = vsub.f32 %v72, %v574
  %576 = vmatpush1.msra.mxu0 %v575
  %577 = vmatprep.subr.mxu0 0.0
  %v578 = vand.u32 %v73, 4294901760
  %v579 = vsub.f32 %v73, %v578
  %580 = vmatpush1.msra.mxu0 %v579
  %581 = vmatprep.subr.mxu0 0.0
  %582 = vmatpush1.msra.mxu0 0.0
  %583 = vmatprep.subr.mxu0 0.0
  %584 = vmatpush1.msra.mxu0 0.0
  %585 = vmatprep.subr.mxu0 0.0
  %586 = vmatpush1.msra.mxu0 0.0
  %587 = vmatprep.subr.mxu0 0.0
  %588 = vmatpush1.msra.mxu0 0.0
  %589 = vmatprep.subr.mxu0 0.0
  %590 = vmatpush1.msra.mxu0 0.0
  %591 = vmatprep.subr.mxu0 0.0
  %592 = vmatpush1.msra.mxu0 0.0
  %593 = vmatprep.subr.mxu0 0.0
  %594 = vmatpush1.msra.mxu0 0.0
  %595 = vmatprep.subr.mxu0 0.0
  %596 = vmatpush1.msra.mxu0 0.0
  %597 = vmatprep.subr.mxu0 0.0
  %598 = vmatpush1.msra.mxu0 0.0
  %599 = vmatprep.subr.mxu0 0.0
  %600 = vmatpush1.msra.mxu0 0.0
  %601 = vmatprep.subr.mxu0 0.0
  %602 = vmatpush1.msra.mxu0 0.0
  %603 = vmatprep.subr.mxu0 0.0
  %604 = vmatpush1.msra.mxu0 0.0
  %605 = vmatprep.subr.mxu0 0.0
  %606 = vmatpush1.msra.mxu0 0.0
  %607 = vmatprep.subr.mxu0 0.0
  %608 = vmatpush1.msra.mxu0 0.0
  %609 = vmatprep.subr.mxu0 0.0
  %610 = vmatpush1.msra.mxu0 0.0
  %611 = vmatprep.subr.mxu0 0.0
  %612 = vmatpush1.msra.mxu0 0.0
  %613 = vmatprep.subr.mxu0 0.0
  %614 = vmatpush1.msra.mxu0 0.0
  %615 = vmatprep.subr.mxu0 0.0
  %616 = vmatpush1.msra.mxu0 0.0
  %617 = vmatprep.subr.mxu0 0.0
  %618 = vmatpush1.msra.mxu0 0.0
  %619 = vmatprep.subr.mxu0 0.0
  %620 = vmatpush1.msra.mxu0 0.0
  %621 = vmatprep.subr.mxu0 0.0
  %622 = vmatpush1.msra.mxu0 0.0
  %623 = vmatprep.subr.mxu0 0.0
  %624 = vmatpush1.msra.mxu0 0.0
  %625 = vmatprep.subr.mxu0 0.0
  %626 = vmatpush1.msra.mxu0 0.0
  %627 = vmatprep.subr.mxu0 0.0
  %628 = vmatpush1.msra.mxu0 0.0
  %629 = vmatprep.subr.mxu0 0.0
  %630 = vmatpush1.msra.mxu0 0.0
  %631 = vmatprep.subr.mxu0 0.0
  %632 = vmatpush1.msra.mxu0 0.0
  %633 = vmatprep.subr.mxu0 0.0
  %634 = vmatpush1.msra.mxu0 0.0
  %635 = vmatprep.subr.mxu0 0.0
  %636 = vmatpush1.msra.mxu0 0.0
  %637 = vmatprep.mubr.f32.mxu0 0.0
  %v638 = vand.u32 %v108, 4294901760
  %v639 = vsub.f32 %v108, %v638
  %640 = vmatmul.mubr.f32.gmra.mrb[0].mxu0 %v639
  %v641 = vpop.f32.mrb[0].mxu0
  %v642 = vadd.f32 %v472, %v641
  %v643 = vpop.f32.mrb[0].mxu0
  %644 = vmatprep.mubr.f32.mxu0 0.0
  %v645 = vand.u32 %v111, 4294901760
  %v646 = vsub.f32 %v111, %v645
  %647 = vmatmul.mubr.f32.gmra.mrb[0].mxu0 %v646
  %v648 = vpop.f32.mrb[0].mxu0
  %v649 = vadd.f32 %v478, %v648
  %v650 = vpop.f32.mrb[0].mxu0
  %651 = vmatprep.mubr.f32.mxu0 0.0
  %v652 = vand.u32 %v114, 4294901760
  %v653 = vsub.f32 %v114, %v652
  %654 = vmatmul.mubr.f32.gmra.mrb[0].mxu0 %v653
  %v655 = vpop.f32.mrb[0].mxu0
  %v656 = vadd.f32 %v484, %v655
  %v657 = vpop.f32.mrb[0].mxu0
  %658 = vmatprep.mubr.f32.mxu0 0.0
  %v659 = vand.u32 %v117, 4294901760
  %v660 = vsub.f32 %v117, %v659
  %661 = vmatmul.mubr.f32.gmra.mrb[0].mxu0 %v660
  %v662 = vpop.f32.mrb[0].mxu0
  %v663 = vadd.f32 %v490, %v662
  %v664 = vpop.f32.mrb[0].mxu0
  %665 = vmatprep.mubr.f32.mxu0 0.0
  %v666 = vand.u32 %v120, 4294901760
  %v667 = vsub.f32 %v120, %v666
  %668 = vmatmul.mubr.f32.gmra.mrb[0].mxu0 %v667
  %v669 = vpop.f32.mrb[0].mxu0
  %v670 = vadd.f32 %v496, %v669
  %v671 = vpop.f32.mrb[0].mxu0
  %672 = vmatprep.mubr.f32.mxu0 0.0
  %v673 = vand.u32 %v123, 4294901760
  %v674 = vsub.f32 %v123, %v673
  %675 = vmatmul.mubr.f32.gmra.mrb[0].mxu0 %v674
  %v676 = vpop.f32.mrb[0].mxu0
  %v677 = vadd.f32 %v502, %v676
  %v678 = vpop.f32.mrb[0].mxu0
  %679 = vmatprep.mubr.f32.mxu0 0.0
  %v680 = vand.u32 %v126, 4294901760
  %v681 = vsub.f32 %v126, %v680
  %682 = vmatmul.mubr.f32.gmra.mrb[0].mxu0 %v681
  %v683 = vpop.f32.mrb[0].mxu0
  %v684 = vadd.f32 %v508, %v683
  %v685 = vpop.f32.mrb[0].mxu0
  %686 = vmatprep.mubr.f32.mxu0 0.0
  %v687 = vand.u32 %v129, 4294901760
  %v688 = vsub.f32 %v129, %v687
  %689 = vmatmul.mubr.f32.gmra.mrb[0].mxu0 %v688
  %v690 = vpop.f32.mrb[0].mxu0
  %v691 = vadd.f32 %v514, %v690
  %v692 = vpop.f32.mrb[0].mxu0
  %693 = vmatprep.mubr.f32.mxu0 0.0
  %v694 = vand.u32 %v132, 4294901760
  %v695 = vsub.f32 %v132, %v694
  %696 = vmatmul.mubr.f32.gmra.mrb[0].mxu0 %v695
  %v697 = vpop.f32.mrb[0].mxu0
  %v698 = vadd.f32 %v520, %v697
  %v699 = vpop.f32.mrb[0].mxu0
  %700 = vmatprep.mubr.f32.mxu0 0.0
  %v701 = vand.u32 %v135, 4294901760
  %v702 = vsub.f32 %v135, %v701
  %703 = vmatmul.mubr.f32.gmra.mrb[0].mxu0 %v702
  %v704 = vpop.f32.mrb[0].mxu0
  %v705 = vadd.f32 %v526, %v704
  %v706 = vpop.f32.mrb[0].mxu0
  %707 = vmatprep.mubr.f32.mxu0 0.0
  %v708 = vand.u32 %v138, 4294901760
  %v709 = vsub.f32 %v138, %v708
  %710 = vmatmul.mubr.f32.gmra.mrb[0].mxu0 %v709
  %v711 = vpop.f32.mrb[0].mxu0
  %v712 = vadd.f32 %v532, %v711
  %v713 = vpop.f32.mrb[0].mxu0
  %714 = vmatprep.mubr.f32.mxu0 0.0
  %v715 = vand.u32 %v141, 4294901760
  %v716 = vsub.f32 %v141, %v715
  %717 = vmatmul.mubr.f32.gmra.mrb[0].mxu0 %v716
  %v718 = vpop.f32.mrb[0].mxu0
  %v719 = vadd.f32 %v538, %v718
  %v720 = vpop.f32.mrb[0].mxu0
  %721 = vmatprep.mubr.f32.mxu0 0.0
  %v722 = vand.u32 %v144, 4294901760
  %v723 = vsub.f32 %v144, %v722
  %724 = vmatmul.mubr.f32.gmra.mrb[0].mxu0 %v723
  %v725 = vpop.f32.mrb[0].mxu0
  %v726 = vadd.f32 %v544, %v725
  %v727 = vpop.f32.mrb[0].mxu0
  %728 = vmatprep.mubr.f32.mxu0 0.0
  %v729 = vand.u32 %v147, 4294901760
  %v730 = vsub.f32 %v147, %v729
  %731 = vmatmul.mubr.f32.gmra.mrb[0].mxu0 %v730
  %v732 = vpop.f32.mrb[0].mxu0
  %v733 = vadd.f32 %v550, %v732
  %v734 = vpop.f32.mrb[0].mxu0
  %735 = vmatprep.mubr.f32.mxu0 0.0
  %v736 = vand.u32 %v150, 4294901760
  %v737 = vsub.f32 %v150, %v736
  %738 = vmatmul.mubr.f32.gmra.mrb[0].mxu0 %v737
  %v739 = vpop.f32.mrb[0].mxu0
  %v740 = vadd.f32 %v556, %v739
  %v741 = vpop.f32.mrb[0].mxu0
  %742 = vmatprep.mubr.f32.mxu0 0.0
  %v743 = vand.u32 %v153, 4294901760
  %v744 = vsub.f32 %v153, %v743
  %745 = vmatmul.mubr.f32.gmra.mrb[0].mxu0 %v744
  %v746 = vpop.f32.mrb[0].mxu0
  %v747 = vadd.f32 %v562, %v746
  %v748 = vpop.f32.mrb[0].mxu0
  %749 = vdwg.mxu0
  %750 = vmatprep.subr.mxu0 0.0
  %v751 = vand.u32 %v70, 4294901760
  %752 = vmatpush1.msra.mxu0 %v751
  %753 = vmatprep.subr.mxu0 0.0
  %v754 = vand.u32 %v71, 4294901760
  %755 = vmatpush1.msra.mxu0 %v754
  %756 = vmatprep.subr.mxu0 0.0
  %v757 = vand.u32 %v72, 4294901760
  %758 = vmatpush1.msra.mxu0 %v757
  %759 = vmatprep.subr.mxu0 0.0
  %v760 = vand.u32 %v73, 4294901760
  %761 = vmatpush1.msra.mxu0 %v760
  %762 = vmatprep.subr.mxu0 0.0
  %763 = vmatpush1.msra.mxu0 0.0
  %764 = vmatprep.subr.mxu0 0.0
  %765 = vmatpush1.msra.mxu0 0.0
  %766 = vmatprep.subr.mxu0 0.0
  %767 = vmatpush1.msra.mxu0 0.0
  %768 = vmatprep.subr.mxu0 0.0
  %769 = vmatpush1.msra.mxu0 0.0
  %770 = vmatprep.subr.mxu0 0.0
  %771 = vmatpush1.msra.mxu0 0.0
  %772 = vmatprep.subr.mxu0 0.0
  %773 = vmatpush1.msra.mxu0 0.0
  %774 = vmatprep.subr.mxu0 0.0
  %775 = vmatpush1.msra.mxu0 0.0
  %776 = vmatprep.subr.mxu0 0.0
  %777 = vmatpush1.msra.mxu0 0.0
  %778 = vmatprep.subr.mxu0 0.0
  %779 = vmatpush1.msra.mxu0 0.0
  %780 = vmatprep.subr.mxu0 0.0
  %781 = vmatpush1.msra.mxu0 0.0
  %782 = vmatprep.subr.mxu0 0.0
  %783 = vmatpush1.msra.mxu0 0.0
  %784 = vmatprep.subr.mxu0 0.0
  %785 = vmatpush1.msra.mxu0 0.0
  %786 = vmatprep.subr.mxu0 0.0
  %787 = vmatpush1.msra.mxu0 0.0
  %788 = vmatprep.subr.mxu0 0.0
  %789 = vmatpush1.msra.mxu0 0.0
  %790 = vmatprep.subr.mxu0 0.0
  %791 = vmatpush1.msra.mxu0 0.0
  %792 = vmatprep.subr.mxu0 0.0
  %793 = vmatpush1.msra.mxu0 0.0
  %794 = vmatprep.subr.mxu0 0.0
  %795 = vmatpush1.msra.mxu0 0.0
  %796 = vmatprep.subr.mxu0 0.0
  %797 = vmatpush1.msra.mxu0 0.0
  %798 = vmatprep.subr.mxu0 0.0
  %799 = vmatpush1.msra.mxu0 0.0
  %800 = vmatprep.subr.mxu0 0.0
  %801 = vmatpush1.msra.mxu0 0.0
  %802 = vmatprep.subr.mxu0 0.0
  %803 = vmatpush1.msra.mxu0 0.0
  %804 = vmatprep.subr.mxu0 0.0
  %805 = vmatpush1.msra.mxu0 0.0
  %806 = vmatprep.subr.mxu0 0.0
  %807 = vmatpush1.msra.mxu0 0.0
  %808 = vmatprep.subr.mxu0 0.0
  %809 = vmatpush1.msra.mxu0 0.0
  %810 = vmatprep.subr.mxu0 0.0
  %811 = vmatpush1.msra.mxu0 0.0
  %812 = vmatprep.subr.mxu0 0.0
  %813 = vmatpush1.msra.mxu0 0.0
  %814 = vmatprep.subr.mxu0 0.0
  %815 = vmatpush1.msra.mxu0 0.0
  %816 = vmatprep.subr.mxu0 0.0
  %817 = vmatpush1.msra.mxu0 0.0
  %818 = vmatprep.mubr.f32.mxu0 0.0
  %v819 = vand.u32 %v108, 4294901760
  %v820 = vsub.f32 %v108, %v819
  %v821 = vand.u32 %v820, 4294901760
  %822 = vmatmul.mubr.f32.gmra.mrb[0].mxu0 %v821
  %v823 = vpop.f32.mrb[0].mxu0
  %v824 = vadd.f32 %v642, %v823
  %v825 = vpop.f32.mrb[0].mxu0
  %826 = vmatprep.mubr.f32.mxu0 0.0
  %v827 = vand.u32 %v111, 4294901760
  %v828 = vsub.f32 %v111, %v827
  %v829 = vand.u32 %v828, 4294901760
  %830 = vmatmul.mubr.f32.gmra.mrb[0].mxu0 %v829
  %v831 = vpop.f32.mrb[0].mxu0
  %v832 = vadd.f32 %v649, %v831
  %v833 = vpop.f32.mrb[0].mxu0
  %834 = vmatprep.mubr.f32.mxu0 0.0
  %v835 = vand.u32 %v114, 4294901760
  %v836 = vsub.f32 %v114, %v835
  %v837 = vand.u32 %v836, 4294901760
  %838 = vmatmul.mubr.f32.gmra.mrb[0].mxu0 %v837
  %v839 = vpop.f32.mrb[0].mxu0
  %v840 = vadd.f32 %v656, %v839
  %v841 = vpop.f32.mrb[0].mxu0
  %842 = vmatprep.mubr.f32.mxu0 0.0
  %v843 = vand.u32 %v117, 4294901760
  %v844 = vsub.f32 %v117, %v843
  %v845 = vand.u32 %v844, 4294901760
  %846 = vmatmul.mubr.f32.gmra.mrb[0].mxu0 %v845
  %v847 = vpop.f32.mrb[0].mxu0
  %v848 = vadd.f32 %v663, %v847
  %v849 = vpop.f32.mrb[0].mxu0
  %850 = vmatprep.mubr.f32.mxu0 0.0
  %v851 = vand.u32 %v120, 4294901760
  %v852 = vsub.f32 %v120, %v851
  %v853 = vand.u32 %v852, 4294901760
  %854 = vmatmul.mubr.f32.gmra.mrb[0].mxu0 %v853
  %v855 = vpop.f32.mrb[0].mxu0
  %v856 = vadd.f32 %v670, %v855
  %v857 = vpop.f32.mrb[0].mxu0
  %858 = vmatprep.mubr.f32.mxu0 0.0
  %v859 = vand.u32 %v123, 4294901760
  %v860 = vsub.f32 %v123, %v859
  %v861 = vand.u32 %v860, 4294901760
  %862 = vmatmul.mubr.f32.gmra.mrb[0].mxu0 %v861
  %v863 = vpop.f32.mrb[0].mxu0
  %v864 = vadd.f32 %v677, %v863
  %v865 = vpop.f32.mrb[0].mxu0
  %866 = vmatprep.mubr.f32.mxu0 0.0
  %v867 = vand.u32 %v126, 4294901760
  %v868 = vsub.f32 %v126, %v867
  %v869 = vand.u32 %v868, 4294901760
  %870 = vmatmul.mubr.f32.gmra.mrb[0].mxu0 %v869
  %v871 = vpop.f32.mrb[0].mxu0
  %v872 = vadd.f32 %v684, %v871
  %v873 = vpop.f32.mrb[0].mxu0
  %874 = vmatprep.mubr.f32.mxu0 0.0
  %v875 = vand.u32 %v129, 4294901760
  %v876 = vsub.f32 %v129, %v875
  %v877 = vand.u32 %v876, 4294901760
  %878 = vmatmul.mubr.f32.gmra.mrb[0].mxu0 %v877
  %v879 = vpop.f32.mrb[0].mxu0
  %v880 = vadd.f32 %v691, %v879
  %v881 = vpop.f32.mrb[0].mxu0
  %882 = vmatprep.mubr.f32.mxu0 0.0
  %v883 = vand.u32 %v132, 4294901760
  %v884 = vsub.f32 %v132, %v883
  %v885 = vand.u32 %v884, 4294901760
  %886 = vmatmul.mubr.f32.gmra.mrb[0].mxu0 %v885
  %v887 = vpop.f32.mrb[0].mxu0
  %v888 = vadd.f32 %v698, %v887
  %v889 = vpop.f32.mrb[0].mxu0
  %890 = vmatprep.mubr.f32.mxu0 0.0
  %v891 = vand.u32 %v135, 4294901760
  %v892 = vsub.f32 %v135, %v891
  %v893 = vand.u32 %v892, 4294901760
  %894 = vmatmul.mubr.f32.gmra.mrb[0].mxu0 %v893
  %v895 = vpop.f32.mrb[0].mxu0
  %v896 = vadd.f32 %v705, %v895
  %v897 = vpop.f32.mrb[0].mxu0
  %898 = vmatprep.mubr.f32.mxu0 0.0
  %v899 = vand.u32 %v138, 4294901760
  %v900 = vsub.f32 %v138, %v899
  %v901 = vand.u32 %v900, 4294901760
  %902 = vmatmul.mubr.f32.gmra.mrb[0].mxu0 %v901
  %v903 = vpop.f32.mrb[0].mxu0
  %v904 = vadd.f32 %v712, %v903
  %v905 = vpop.f32.mrb[0].mxu0
  %906 = vmatprep.mubr.f32.mxu0 0.0
  %v907 = vand.u32 %v141, 4294901760
  %v908 = vsub.f32 %v141, %v907
  %v909 = vand.u32 %v908, 4294901760
  %910 = vmatmul.mubr.f32.gmra.mrb[0].mxu0 %v909
  %v911 = vpop.f32.mrb[0].mxu0
  %v912 = vadd.f32 %v719, %v911
  %v913 = vpop.f32.mrb[0].mxu0
  %914 = vmatprep.mubr.f32.mxu0 0.0
  %v915 = vand.u32 %v144, 4294901760
  %v916 = vsub.f32 %v144, %v915
  %v917 = vand.u32 %v916, 4294901760
  %918 = vmatmul.mubr.f32.gmra.mrb[0].mxu0 %v917
  %v919 = vpop.f32.mrb[0].mxu0
  %v920 = vadd.f32 %v726, %v919
  %v921 = vpop.f32.mrb[0].mxu0
  %922 = vmatprep.mubr.f32.mxu0 0.0
  %v923 = vand.u32 %v147, 4294901760
  %v924 = vsub.f32 %v147, %v923
  %v925 = vand.u32 %v924, 4294901760
  %926 = vmatmul.mubr.f32.gmra.mrb[0].mxu0 %v925
  %v927 = vpop.f32.mrb[0].mxu0
  %v928 = vadd.f32 %v733, %v927
  %v929 = vpop.f32.mrb[0].mxu0
  %930 = vmatprep.mubr.f32.mxu0 0.0
  %v931 = vand.u32 %v150, 4294901760
  %v932 = vsub.f32 %v150, %v931
  %v933 = vand.u32 %v932, 4294901760
  %934 = vmatmul.mubr.f32.gmra.mrb[0].mxu0 %v933
  %v935 = vpop.f32.mrb[0].mxu0
  %v936 = vadd.f32 %v740, %v935
  %v937 = vpop.f32.mrb[0].mxu0
  %938 = vmatprep.mubr.f32.mxu0 0.0
  %v939 = vand.u32 %v153, 4294901760
  %v940 = vsub.f32 %v153, %v939
  %v941 = vand.u32 %v940, 4294901760
  %942 = vmatmul.mubr.f32.gmra.mrb[0].mxu0 %v941
  %v943 = vpop.f32.mrb[0].mxu0
  %v944 = vadd.f32 %v747, %v943
  %v945 = vpop.f32.mrb[0].mxu0
  %946 = vdwg.mxu0
  %947 = vmatprep.subr.mxu0 0.0
  %v948 = vand.u32 %v70, 4294901760
  %v949 = vsub.f32 %v70, %v948
  %v950 = vand.u32 %v949, 4294901760
  %951 = vmatpush1.msra.mxu0 %v950
  %952 = vmatprep.subr.mxu0 0.0
  %v953 = vand.u32 %v71, 4294901760
  %v954 = vsub.f32 %v71, %v953
  %v955 = vand.u32 %v954, 4294901760
  %956 = vmatpush1.msra.mxu0 %v955
  %957 = vmatprep.subr.mxu0 0.0
  %v958 = vand.u32 %v72, 4294901760
  %v959 = vsub.f32 %v72, %v958
  %v960 = vand.u32 %v959, 4294901760
  %961 = vmatpush1.msra.mxu0 %v960
  %962 = vmatprep.subr.mxu0 0.0
  %v963 = vand.u32 %v73, 4294901760
  %v964 = vsub.f32 %v73, %v963
  %v965 = vand.u32 %v964, 4294901760
  %966 = vmatpush1.msra.mxu0 %v965
  %967 = vmatprep.subr.mxu0 0.0
  %968 = vmatpush1.msra.mxu0 0.0
  %969 = vmatprep.subr.mxu0 0.0
  %970 = vmatpush1.msra.mxu0 0.0
  %971 = vmatprep.subr.mxu0 0.0
  %972 = vmatpush1.msra.mxu0 0.0
  %973 = vmatprep.subr.mxu0 0.0
  %974 = vmatpush1.msra.mxu0 0.0
  %975 = vmatprep.subr.mxu0 0.0
  %976 = vmatpush1.msra.mxu0 0.0
  %977 = vmatprep.subr.mxu0 0.0
  %978 = vmatpush1.msra.mxu0 0.0
  %979 = vmatprep.subr.mxu0 0.0
  %980 = vmatpush1.msra.mxu0 0.0
  %981 = vmatprep.subr.mxu0 0.0
  %982 = vmatpush1.msra.mxu0 0.0
  %983 = vmatprep.subr.mxu0 0.0
  %984 = vmatpush1.msra.mxu0 0.0
  %985 = vmatprep.subr.mxu0 0.0
  %986 = vmatpush1.msra.mxu0 0.0
  %987 = vmatprep.subr.mxu0 0.0
  %988 = vmatpush1.msra.mxu0 0.0
  %989 = vmatprep.subr.mxu0 0.0
  %990 = vmatpush1.msra.mxu0 0.0
  %991 = vmatprep.subr.mxu0 0.0
  %992 = vmatpush1.msra.mxu0 0.0
  %993 = vmatprep.subr.mxu0 0.0
  %994 = vmatpush1.msra.mxu0 0.0
  %995 = vmatprep.subr.mxu0 0.0
  %996 = vmatpush1.msra.mxu0 0.0
  %997 = vmatprep.subr.mxu0 0.0
  %998 = vmatpush1.msra.mxu0 0.0
  %999 = vmatprep.subr.mxu0 0.0
  %1000 = vmatpush1.msra.mxu0 0.0
  %1001 = vmatprep.subr.mxu0 0.0
  %1002 = vmatpush1.msra.mxu0 0.0
  %1003 = vmatprep.subr.mxu0 0.0
  %1004 = vmatpush1.msra.mxu0 0.0
  %1005 = vmatprep.subr.mxu0 0.0
  %1006 = vmatpush1.msra.mxu0 0.0
  %1007 = vmatprep.subr.mxu0 0.0
  %1008 = vmatpush1.msra.mxu0 0.0
  %1009 = vmatprep.subr.mxu0 0.0
  %1010 = vmatpush1.msra.mxu0 0.0
  %1011 = vmatprep.subr.mxu0 0.0
  %1012 = vmatpush1.msra.mxu0 0.0
  %1013 = vmatprep.subr.mxu0 0.0
  %1014 = vmatpush1.msra.mxu0 0.0
  %1015 = vmatprep.subr.mxu0 0.0
  %1016 = vmatpush1.msra.mxu0 0.0
  %1017 = vmatprep.subr.mxu0 0.0
  %1018 = vmatpush1.msra.mxu0 0.0
  %1019 = vmatprep.subr.mxu0 0.0
  %1020 = vmatpush1.msra.mxu0 0.0
  %1021 = vmatprep.subr.mxu0 0.0
  %1022 = vmatpush1.msra.mxu0 0.0
  %1023 = vmatprep.mubr.f32.mxu0 0.0
  %v1024 = vand.u32 %v108, 4294901760
  %1025 = vmatmul.mubr.f32.gmra.mrb[0].mxu0 %v1024
  %v1026 = vpop.f32.mrb[0].mxu0
  %v1027 = vadd.f32 %v824, %v1026
  %v1028 = vpop.f32.mrb[0].mxu0
  %1029 = vmatprep.mubr.f32.mxu0 0.0
  %v1030 = vand.u32 %v111, 4294901760
  %1031 = vmatmul.mubr.f32.gmra.mrb[0].mxu0 %v1030
  %v1032 = vpop.f32.mrb[0].mxu0
  %v1033 = vadd.f32 %v832, %v1032
  %v1034 = vpop.f32.mrb[0].mxu0
  %1035 = vmatprep.mubr.f32.mxu0 0.0
  %v1036 = vand.u32 %v114, 4294901760
  %1037 = vmatmul.mubr.f32.gmra.mrb[0].mxu0 %v1036
  %v1038 = vpop.f32.mrb[0].mxu0
  %v1039 = vadd.f32 %v840, %v1038
  %v1040 = vpop.f32.mrb[0].mxu0
  %1041 = vmatprep.mubr.f32.mxu0 0.0
  %v1042 = vand.u32 %v117, 4294901760
  %1043 = vmatmul.mubr.f32.gmra.mrb[0].mxu0 %v1042
  %v1044 = vpop.f32.mrb[0].mxu0
  %v1045 = vadd.f32 %v848, %v1044
  %v1046 = vpop.f32.mrb[0].mxu0
  %1047 = vmatprep.mubr.f32.mxu0 0.0
  %v1048 = vand.u32 %v120, 4294901760
  %1049 = vmatmul.mubr.f32.gmra.mrb[0].mxu0 %v1048
  %v1050 = vpop.f32.mrb[0].mxu0
  %v1051 = vadd.f32 %v856, %v1050
  %v1052 = vpop.f32.mrb[0].mxu0
  %1053 = vmatprep.mubr.f32.mxu0 0.0
  %v1054 = vand.u32 %v123, 4294901760
  %1055 = vmatmul.mubr.f32.gmra.mrb[0].mxu0 %v1054
  %v1056 = vpop.f32.mrb[0].mxu0
  %v1057 = vadd.f32 %v864, %v1056
  %v1058 = vpop.f32.mrb[0].mxu0
  %1059 = vmatprep.mubr.f32.mxu0 0.0
  %v1060 = vand.u32 %v126, 4294901760
  %1061 = vmatmul.mubr.f32.gmra.mrb[0].mxu0 %v1060
  %v1062 = vpop.f32.mrb[0].mxu0
  %v1063 = vadd.f32 %v872, %v1062
  %v1064 = vpop.f32.mrb[0].mxu0
  %1065 = vmatprep.mubr.f32.mxu0 0.0
  %v1066 = vand.u32 %v129, 4294901760
  %1067 = vmatmul.mubr.f32.gmra.mrb[0].mxu0 %v1066
  %v1068 = vpop.f32.mrb[0].mxu0
  %v1069 = vadd.f32 %v880, %v1068
  %v1070 = vpop.f32.mrb[0].mxu0
  %1071 = vmatprep.mubr.f32.mxu0 0.0
  %v1072 = vand.u32 %v132, 4294901760
  %1073 = vmatmul.mubr.f32.gmra.mrb[0].mxu0 %v1072
  %v1074 = vpop.f32.mrb[0].mxu0
  %v1075 = vadd.f32 %v888, %v1074
  %v1076 = vpop.f32.mrb[0].mxu0
  %1077 = vmatprep.mubr.f32.mxu0 0.0
  %v1078 = vand.u32 %v135, 4294901760
  %1079 = vmatmul.mubr.f32.gmra.mrb[0].mxu0 %v1078
  %v1080 = vpop.f32.mrb[0].mxu0
  %v1081 = vadd.f32 %v896, %v1080
  %v1082 = vpop.f32.mrb[0].mxu0
  %1083 = vmatprep.mubr.f32.mxu0 0.0
  %v1084 = vand.u32 %v138, 4294901760
  %1085 = vmatmul.mubr.f32.gmra.mrb[0].mxu0 %v1084
  %v1086 = vpop.f32.mrb[0].mxu0
  %v1087 = vadd.f32 %v904, %v1086
  %v1088 = vpop.f32.mrb[0].mxu0
  %1089 = vmatprep.mubr.f32.mxu0 0.0
  %v1090 = vand.u32 %v141, 4294901760
  %1091 = vmatmul.mubr.f32.gmra.mrb[0].mxu0 %v1090
  %v1092 = vpop.f32.mrb[0].mxu0
  %v1093 = vadd.f32 %v912, %v1092
  %v1094 = vpop.f32.mrb[0].mxu0
  %1095 = vmatprep.mubr.f32.mxu0 0.0
  %v1096 = vand.u32 %v144, 4294901760
  %1097 = vmatmul.mubr.f32.gmra.mrb[0].mxu0 %v1096
  %v1098 = vpop.f32.mrb[0].mxu0
  %v1099 = vadd.f32 %v920, %v1098
  %v1100 = vpop.f32.mrb[0].mxu0
  %1101 = vmatprep.mubr.f32.mxu0 0.0
  %v1102 = vand.u32 %v147, 4294901760
  %1103 = vmatmul.mubr.f32.gmra.mrb[0].mxu0 %v1102
  %v1104 = vpop.f32.mrb[0].mxu0
  %v1105 = vadd.f32 %v928, %v1104
  %v1106 = vpop.f32.mrb[0].mxu0
  %1107 = vmatprep.mubr.f32.mxu0 0.0
  %v1108 = vand.u32 %v150, 4294901760
  %1109 = vmatmul.mubr.f32.gmra.mrb[0].mxu0 %v1108
  %v1110 = vpop.f32.mrb[0].mxu0
  %v1111 = vadd.f32 %v936, %v1110
  %v1112 = vpop.f32.mrb[0].mxu0
  %1113 = vmatprep.mubr.f32.mxu0 0.0
  %v1114 = vand.u32 %v153, 4294901760
  %1115 = vmatmul.mubr.f32.gmra.mrb[0].mxu0 %v1114
  %v1116 = vpop.f32.mrb[0].mxu0
  %v1117 = vadd.f32 %v944, %v1116
  %v1118 = vpop.f32.mrb[0].mxu0
  %1119 = vdwg.mxu0
  %1120 = vmatprep.subr.mxu0 0.0
  %v1121 = vand.u32 %v70, 4294901760
  %1122 = vmatpush1.msra.mxu0 %v1121
  %1123 = vmatprep.subr.mxu0 0.0
  %v1124 = vand.u32 %v71, 4294901760
  %1125 = vmatpush1.msra.mxu0 %v1124
  %1126 = vmatprep.subr.mxu0 0.0
  %v1127 = vand.u32 %v72, 4294901760
  %1128 = vmatpush1.msra.mxu0 %v1127
  %1129 = vmatprep.subr.mxu0 0.0
  %v1130 = vand.u32 %v73, 4294901760
  %1131 = vmatpush1.msra.mxu0 %v1130
  %1132 = vmatprep.subr.mxu0 0.0
  %1133 = vmatpush1.msra.mxu0 0.0
  %1134 = vmatprep.subr.mxu0 0.0
  %1135 = vmatpush1.msra.mxu0 0.0
  %1136 = vmatprep.subr.mxu0 0.0
  %1137 = vmatpush1.msra.mxu0 0.0
  %1138 = vmatprep.subr.mxu0 0.0
  %1139 = vmatpush1.msra.mxu0 0.0
  %1140 = vmatprep.subr.mxu0 0.0
  %1141 = vmatpush1.msra.mxu0 0.0
  %1142 = vmatprep.subr.mxu0 0.0
  %1143 = vmatpush1.msra.mxu0 0.0
  %1144 = vmatprep.subr.mxu0 0.0
  %1145 = vmatpush1.msra.mxu0 0.0
  %1146 = vmatprep.subr.mxu0 0.0
  %1147 = vmatpush1.msra.mxu0 0.0
  %1148 = vmatprep.subr.mxu0 0.0
  %1149 = vmatpush1.msra.mxu0 0.0
  %1150 = vmatprep.subr.mxu0 0.0
  %1151 = vmatpush1.msra.mxu0 0.0
  %1152 = vmatprep.subr.mxu0 0.0
  %1153 = vmatpush1.msra.mxu0 0.0
  %1154 = vmatprep.subr.mxu0 0.0
  %1155 = vmatpush1.msra.mxu0 0.0
  %1156 = vmatprep.subr.mxu0 0.0
  %1157 = vmatpush1.msra.mxu0 0.0
  %1158 = vmatprep.subr.mxu0 0.0
  %1159 = vmatpush1.msra.mxu0 0.0
  %1160 = vmatprep.subr.mxu0 0.0
  %1161 = vmatpush1.msra.mxu0 0.0
  %1162 = vmatprep.subr.mxu0 0.0
  %1163 = vmatpush1.msra.mxu0 0.0
  %1164 = vmatprep.subr.mxu0 0.0
  %1165 = vmatpush1.msra.mxu0 0.0
  %1166 = vmatprep.subr.mxu0 0.0
  %1167 = vmatpush1.msra.mxu0 0.0
  %1168 = vmatprep.subr.mxu0 0.0
  %1169 = vmatpush1.msra.mxu0 0.0
  %1170 = vmatprep.subr.mxu0 0.0
  %1171 = vmatpush1.msra.mxu0 0.0
  %1172 = vmatprep.subr.mxu0 0.0
  %1173 = vmatpush1.msra.mxu0 0.0
  %1174 = vmatprep.subr.mxu0 0.0
  %1175 = vmatpush1.msra.mxu0 0.0
  %1176 = vmatprep.subr.mxu0 0.0
  %1177 = vmatpush1.msra.mxu0 0.0
  %1178 = vmatprep.subr.mxu0 0.0
  %1179 = vmatpush1.msra.mxu0 0.0
  %1180 = vmatprep.subr.mxu0 0.0
  %1181 = vmatpush1.msra.mxu0 0.0
  %1182 = vmatprep.subr.mxu0 0.0
  %1183 = vmatpush1.msra.mxu0 0.0
  %1184 = vmatprep.subr.mxu0 0.0
  %1185 = vmatpush1.msra.mxu0 0.0
  %1186 = vmatprep.subr.mxu0 0.0
  %1187 = vmatpush1.msra.mxu0 0.0
  %1188 = vmatprep.mubr.f32.mxu0 0.0
  %v1189 = vand.u32 %v108, 4294901760
  %1190 = vmatmul.mubr.f32.gmra.mrb[0].mxu0 %v1189
  %v1191 = vpop.f32.mrb[0].mxu0
  %v1192 = vadd.f32 %v1027, %v1191
  %v1193 = vpop.f32.mrb[0].mxu0
  %1194 = vmatprep.mubr.f32.mxu0 0.0
  %v1195 = vand.u32 %v111, 4294901760
  %1196 = vmatmul.mubr.f32.gmra.mrb[0].mxu0 %v1195
  %v1197 = vpop.f32.mrb[0].mxu0
  %v1198 = vadd.f32 %v1033, %v1197
  %v1199 = vpop.f32.mrb[0].mxu0
  %1200 = vmatprep.mubr.f32.mxu0 0.0
  %v1201 = vand.u32 %v114, 4294901760
  %1202 = vmatmul.mubr.f32.gmra.mrb[0].mxu0 %v1201
  %v1203 = vpop.f32.mrb[0].mxu0
  %v1204 = vadd.f32 %v1039, %v1203
  %v1205 = vpop.f32.mrb[0].mxu0
  %1206 = vmatprep.mubr.f32.mxu0 0.0
  %v1207 = vand.u32 %v117, 4294901760
  %1208 = vmatmul.mubr.f32.gmra.mrb[0].mxu0 %v1207
  %v1209 = vpop.f32.mrb[0].mxu0
  %v1210 = vadd.f32 %v1045, %v1209
  %v1211 = vpop.f32.mrb[0].mxu0
  %1212 = vmatprep.mubr.f32.mxu0 0.0
  %v1213 = vand.u32 %v120, 4294901760
  %1214 = vmatmul.mubr.f32.gmra.mrb[0].mxu0 %v1213
  %v1215 = vpop.f32.mrb[0].mxu0
  %v1216 = vadd.f32 %v1051, %v1215
  %v1217 = vpop.f32.mrb[0].mxu0
  %1218 = vmatprep.mubr.f32.mxu0 0.0
  %v1219 = vand.u32 %v123, 4294901760
  %1220 = vmatmul.mubr.f32.gmra.mrb[0].mxu0 %v1219
  %v1221 = vpop.f32.mrb[0].mxu0
  %v1222 = vadd.f32 %v1057, %v1221
  %v1223 = vpop.f32.mrb[0].mxu0
  %1224 = vmatprep.mubr.f32.mxu0 0.0
  %v1225 = vand.u32 %v126, 4294901760
  %1226 = vmatmul.mubr.f32.gmra.mrb[0].mxu0 %v1225
  %v1227 = vpop.f32.mrb[0].mxu0
  %v1228 = vadd.f32 %v1063, %v1227
  %v1229 = vpop.f32.mrb[0].mxu0
  %1230 = vmatprep.mubr.f32.mxu0 0.0
  %v1231 = vand.u32 %v129, 4294901760
  %1232 = vmatmul.mubr.f32.gmra.mrb[0].mxu0 %v1231
  %v1233 = vpop.f32.mrb[0].mxu0
  %v1234 = vadd.f32 %v1069, %v1233
  %v1235 = vpop.f32.mrb[0].mxu0
  %1236 = vmatprep.mubr.f32.mxu0 0.0
  %v1237 = vand.u32 %v132, 4294901760
  %1238 = vmatmul.mubr.f32.gmra.mrb[0].mxu0 %v1237
  %v1239 = vpop.f32.mrb[0].mxu0
  %v1240 = vadd.f32 %v1075, %v1239
  %v1241 = vpop.f32.mrb[0].mxu0
  %1242 = vmatprep.mubr.f32.mxu0 0.0
  %v1243 = vand.u32 %v135, 4294901760
  %1244 = vmatmul.mubr.f32.gmra.mrb[0].mxu0 %v1243
  %v1245 = vpop.f32.mrb[0].mxu0
  %v1246 = vadd.f32 %v1081, %v1245
  %v1247 = vpop.f32.mrb[0].mxu0
  %1248 = vmatprep.mubr.f32.mxu0 0.0
  %v1249 = vand.u32 %v138, 4294901760
  %1250 = vmatmul.mubr.f32.gmra.mrb[0].mxu0 %v1249
  %v1251 = vpop.f32.mrb[0].mxu0
  %v1252 = vadd.f32 %v1087, %v1251
  %v1253 = vpop.f32.mrb[0].mxu0
  %1254 = vmatprep.mubr.f32.mxu0 0.0
  %v1255 = vand.u32 %v141, 4294901760
  %1256 = vmatmul.mubr.f32.gmra.mrb[0].mxu0 %v1255
  %v1257 = vpop.f32.mrb[0].mxu0
  %v1258 = vadd.f32 %v1093, %v1257
  %v1259 = vpop.f32.mrb[0].mxu0
  %1260 = vmatprep.mubr.f32.mxu0 0.0
  %v1261 = vand.u32 %v144, 4294901760
  %1262 = vmatmul.mubr.f32.gmra.mrb[0].mxu0 %v1261
  %v1263 = vpop.f32.mrb[0].mxu0
  %v1264 = vadd.f32 %v1099, %v1263
  %v1265 = vpop.f32.mrb[0].mxu0
  %1266 = vmatprep.mubr.f32.mxu0 0.0
  %v1267 = vand.u32 %v147, 4294901760
  %1268 = vmatmul.mubr.f32.gmra.mrb[0].mxu0 %v1267
  %v1269 = vpop.f32.mrb[0].mxu0
  %v1270 = vadd.f32 %v1105, %v1269
  %v1271 = vpop.f32.mrb[0].mxu0
  %1272 = vmatprep.mubr.f32.mxu0 0.0
  %v1273 = vand.u32 %v150, 4294901760
  %1274 = vmatmul.mubr.f32.gmra.mrb[0].mxu0 %v1273
  %v1275 = vpop.f32.mrb[0].mxu0
  %v1276 = vadd.f32 %v1111, %v1275
  %v1277 = vpop.f32.mrb[0].mxu0
  %1278 = vmatprep.mubr.f32.mxu0 0.0
  %v1279 = vand.u32 %v153, 4294901760
  %1280 = vmatmul.mubr.f32.gmra.mrb[0].mxu0 %v1279
  %v1281 = vpop.f32.mrb[0].mxu0
  %v1282 = vadd.f32 %v1117, %v1281
  %v1283 = vpop.f32.mrb[0].mxu0
  %1284 = vdwg.mxu0
  %1285 = vst.msk [vmem:[%s2] sm:$0xff] %vm106, %v1192
  %1286 = vst.msk [vmem:[%s2 + $0x8] sm:$0xff] %vm106, %v1198
  %1287 = vst.msk [vmem:[%s2 + $0x10] sm:$0xff] %vm106, %v1204
  %1288 = vst.msk [vmem:[%s2 + $0x18] sm:$0xff] %vm106, %v1210
  %1289 = vst.msk [vmem:[%s2 + $0x20] sm:$0xff] %vm106, %v1216
  %1290 = vst.msk [vmem:[%s2 + $0x28] sm:$0xff] %vm106, %v1222
  %1291 = vst.msk [vmem:[%s2 + $0x30] sm:$0xff] %vm106, %v1228
  %1292 = vst.msk [vmem:[%s2 + $0x38] sm:$0xff] %vm106, %v1234
  %1293 = vst.msk [vmem:[%s2 + $0x40] sm:$0xff] %vm106, %v1240
  %1294 = vst.msk [vmem:[%s2 + $0x48] sm:$0xff] %vm106, %v1246
  %1295 = vst.msk [vmem:[%s2 + $0x50] sm:$0xff] %vm106, %v1252
  %1296 = vst.msk [vmem:[%s2 + $0x58] sm:$0xff] %vm106, %v1258
  %1297 = vst.msk [vmem:[%s2 + $0x60] sm:$0xff] %vm106, %v1264
  %1298 = vst.msk [vmem:[%s2 + $0x68] sm:$0xff] %vm106, %v1270
  %1299 = vst.msk [vmem:[%s2 + $0x70] sm:$0xff] %vm106, %v1276
  %1300 = vst.msk [vmem:[%s2 + $0x78] sm:$0xff] %vm106, %v1282
  // Predicated region
  $region10: #{encoder_forward.1} parent=0 // pred_check
    _
  $region11: #{encoder_forward.1} parent=0 // pred_check_branch
    %1302 = sbr.rel (0) target = $region13
  $region12: #{encoder_forward.1} parent=0 // pred_region
    _
  $region13: #{encoder_forward.1} parent=0 // pred_fallthru
    _
  // Predicated region
  $region14: #{encoder_forward.1} parent=0 // pred_check
    _
  $region15: #{encoder_forward.1} parent=0 // pred_check_branch
    %1304 = sbr.rel (0) target = $region17
  $region16: #{encoder_forward.1} parent=0 // pred_region
    _
  $region17: #{encoder_forward.1} parent=0 // pred_fallthru
    _

</llo_original>
